<compile_context>
chip_gen: v7x
topology: tpu7x:2x2x1
jax: 0.10.0
libtpu: 0.0.40
codegen_flags: <defaults>
</compile_context>

<pallas_src>
import math

import jax
import jax.numpy as jnp
from jax.experimental import pallas as pl
from jax.experimental.pallas import tpu as pltpu

_LANE = 128


# ---------------------------------------------------------------------------
# Kernels
# ---------------------------------------------------------------------------
def _softmax_kernel(x_ref, o_ref):
    """Numerically-stable softmax over the last axis of the VMEM tile."""
    x = x_ref[...].astype(jnp.float32)
    m = jnp.max(x, axis=-1, keepdims=True)
    e = jnp.exp(x - m)
    s = jnp.sum(e, axis=-1, keepdims=True)
    inv = pl.reciprocal(s, approx=True)        # EUP slot (free on a mem-bound kernel)
    inv = inv * (2.0 - s * inv)                # one Newton step -> ~f32-exact
    o_ref[...] = (e * inv).astype(o_ref.dtype)


def _softmax_rescale_kernel(x_ref, s_ref, o_ref):
    """Fused softmax + per-row rescale: o = scaling_factor * softmax(x)."""
    x = x_ref[...].astype(jnp.float32)
    m = jnp.max(x, axis=-1, keepdims=True)
    e = jnp.exp(x - m)
    den = jnp.sum(e, axis=-1, keepdims=True)
    inv = pl.reciprocal(den, approx=True)
    inv = inv * (2.0 - den * inv)
    scale = s_ref[...].astype(jnp.float32)     # (tb, 1), broadcast over lanes
    o_ref[...] = (e * (scale * inv)).astype(o_ref.dtype)


# ---------------------------------------------------------------------------
# Tiling / VMEM sizing
# ---------------------------------------------------------------------------
def _vmem_capacity_bytes():
    try:
        return int(pltpu.get_tpu_info().vmem_capacity_bytes)
    except Exception:
        return 64 * 1024 * 1024  # v7x per-TC capacity: smallest current gen


def _sublane_multiple(*dtypes):
    # rows per sublane pack: 4B -> 8, 2B (bf16) -> 16, 1B (int8/fp8) -> 32
    return max(max(8, 32 // jnp.dtype(d).itemsize) for d in dtypes)


def _row_tile(batch, n_pad, in_dtype, out_dtype, vmem_capacity):
    """Largest sublane-aligned row tile hitting the bytes-per-block target."""
    in_b = jnp.dtype(in_dtype).itemsize
    out_b = jnp.dtype(out_dtype).itemsize
    sub = _sublane_multiple(in_dtype, out_dtype)

    # ~2 MiB of input per block on v7x (64 MiB VMEM), ~4 MiB on v5e/v6e
    # (128 MiB): large enough for the 85%+ HBM-roofline regime.
    target_in_block = max(2 * 1024 * 1024, vmem_capacity // 32)
    tb = target_in_block // max(1, n_pad * in_b)

    # Cap by a VMEM budget: double-buffered in+out blocks + ~2 f32 temps.
    tile_budget = vmem_capacity // 4
    bytes_per_row = 2 * (in_b + out_b) * n_pad + 2 * 4 * n_pad
    tb = min(tb, tile_budget // max(1, bytes_per_row))
    # TODO(synk): for out_features so large that even an 8-row block blows the
    # budget, switch to a feature-tiled online softmax (running max/sum).

    tb = max(sub, (tb // sub) * sub)

    if tb >= batch:
        # Whole batch fits in one block: split into >=2 blocks when possible so
        # both v7x TensorCores get work via the "parallel" grid axis.
        if batch >= 2 * sub:
            half = pl.cdiv(batch, 2)
            tb = ((half + sub - 1) // sub) * sub
        else:
            tb = batch
    return tb


def _vmem_limit_bytes(tb, n_pad, in_dtype, out_dtype, has_scale, vmem_capacity):
    in_b = jnp.dtype(in_dtype).itemsize
    out_b = jnp.dtype(out_dtype).itemsize
    blocks = 2 * tb * n_pad * (in_b + out_b)      # double-buffered streams
    if has_scale:
        blocks += 2 * tb * 4
    temps = 4 * tb * n_pad * 4                    # generous f32 intermediates
    needed = blocks + temps + 8 * 1024 * 1024     # headroom
    lo = 32 * 1024 * 1024
    hi = max(lo, vmem_capacity - 16 * 1024 * 1024)
    return int(min(hi, max(lo, needed)))


# ---------------------------------------------------------------------------
# Forward wrapper
# ---------------------------------------------------------------------------
def nb_layer_forward(x, scaling_factor=None):
    """Row-wise softmax over the last axis (optionally fused with rescale).

    x: (batch, out_features).  The feature axis is kept whole per block
    (padded to a multiple of 128 lanes with -inf if needed); the batch axis
    is tiled and software-pipelined.  Boundary tiles are clipped on write.
    """
    B, N = x.shape
    n_pad = ((N + _LANE - 1) // _LANE) * _LANE
    x_in = x
    if n_pad != N:
        # Lane-dense padding: -inf logits -> exp()==0, softmax over the real
        # features is unchanged, and the output store is an unmasked vst.
        x_in = jnp.pad(x, ((0, 0), (0, n_pad - N)), constant_values=-jnp.inf)

    capacity = _vmem_capacity_bytes()
    tb = _row_tile(B, n_pad, x.dtype, x.dtype, capacity)
    grid = (pl.cdiv(B, tb),)

    in_specs = [pl.BlockSpec((tb, n_pad), lambda i: (i, 0))]
    operands = [x_in]
    if scaling_factor is None:
        kernel = _softmax_kernel
    else:
        kernel = _softmax_rescale_kernel
        s = jnp.asarray(scaling_factor, dtype=jnp.float32)
        s = jnp.broadcast_to(jnp.reshape(s, (-1, 1)), (B, 1))
        in_specs.append(pl.BlockSpec((tb, 1), lambda i: (i, 0)))
        operands.append(s)

    vmem_limit = _vmem_limit_bytes(tb, n_pad, x.dtype, x.dtype,
                                   scaling_factor is not None, capacity)

    out = pl.pallas_call(
        kernel,
        out_shape=jax.ShapeDtypeStruct((B, n_pad), x.dtype),
        grid_spec=pl.GridSpec(
            grid=grid,
            in_specs=in_specs,
            out_specs=pl.BlockSpec((tb, n_pad), lambda i: (i, 0)),
        ),
        compiler_params=pltpu.CompilerParams(
            dimension_semantics=("parallel",),
            vmem_limit_bytes=vmem_limit,
        ),
    )(*operands)

    if n_pad != N:
        out = out[:, :N]
    return out


# ---------------------------------------------------------------------------
# Module port
# ---------------------------------------------------------------------------
class NBLayerPallas:
    """JAX/Pallas port of NB_Layer (forward = softmax along dim=-1)."""

    def __init__(self, out_features, r_init=2, scaling_type="sum"):
        # Same deterministic init as torch.full(log(r_init - 1), (1, F)).
        self.log_r = jnp.full((1, out_features), math.log(r_init - 1),
                              dtype=jnp.float32)
        self._scaling_type = scaling_type
        if self._scaling_type == "sum":
            self._activation = "softmax"

    @property
    def dispersion(self):
        return jnp.exp(self.log_r) + 1.0

    def forward(self, x):
        return nb_layer_forward(x)

    def forward_rescaled(self, x, scaling_factor):
        """Fused forward + rescale (avoids an extra full HBM pass)."""
        return nb_layer_forward(x, scaling_factor=scaling_factor)

    @staticmethod
    def rescale(scaling_factor, model_output):
        return scaling_factor * model_output

    # TODO(synk): log_prob/logNBdensity needs lgamma, which has no clean
    # Pallas TPU lowering; it stays in plain JAX outside the kernel.
    def log_prob(self, model_output, target, scaling_factor):
        eps = 1e-10
        r = jnp.exp(self.log_r) + 1.0
        m = self.rescale(scaling_factor, model_output)
        k = target
        inv = 1.0 / (r + m + eps)
        x = jax.lax.lgamma(k + r) - jax.lax.lgamma(r) - jax.lax.lgamma(k + 1.0)
        x = x + k * jnp.log(m * inv + eps)
        x = x + r * jnp.log(r * inv)
        return x


if __name__ == "__main__":
    key = jax.random.PRNGKey(0)
    k0, k1, k2, k3 = jax.random.split(key, 4)

    # 1) Small f32 case at module-consistent shapes; N=32 exercises the
    #    lane-padding path (32 -> 128) and the >=2-block grid split.
    B0, N0 = 2, 32
    x0 = jax.random.normal(k0, (B0, N0), dtype=jnp.float32)
    layer0 = NBLayerPallas(N0, r_init=2, scaling_type="sum")
    out0 = jax.block_until_ready(layer0.forward(x0))
    ref0 = jax.nn.softmax(x0, axis=-1)
    assert jnp.allclose(out0, ref0, atol=1e-5), "softmax mismatch (padded f32)"
    rs0 = jnp.sum(out0, axis=-1)
    assert jnp.allclose(rs0, jnp.ones_like(rs0), atol=1e-5)

    # 2) Tiled bf16 case: grid > 1, non-divisible batch, packed-dtype tiling.
    B1, N1 = 1000, 256
    x1 = jax.random.normal(k1, (B1, N1), dtype=jnp.bfloat16)
    layer1 = NBLayerPallas(N1)
    out1 = jax.block_until_ready(layer1.forward(x1))
    ref1 = jax.nn.softmax(x1.astype(jnp.float32), axis=-1)
    assert jnp.allclose(out1.astype(jnp.float32), ref1, atol=2e-3), \
        "softmax mismatch (tiled bf16)"
    rs1 = jnp.sum(out1.astype(jnp.float32), axis=-1)
    assert jnp.allclose(rs1, jnp.ones_like(rs1), atol=1e-2)

    # 3) Fused softmax + per-row rescale, non-128-multiple features, grid > 1.
    B2, N2 = 200, 300
    x2 = jax.random.normal(k2, (B2, N2), dtype=jnp.float32)
    sf = jax.random.uniform(k3, (B2, 1), minval=0.5, maxval=2.0,
                            dtype=jnp.float32)
    layer2 = NBLayerPallas(N2)
    out2 = jax.block_until_ready(layer2.forward_rescaled(x2, sf))
    ref2 = sf * jax.nn.softmax(x2, axis=-1)
    assert jnp.allclose(out2, ref2, atol=1e-5), "fused rescale mismatch"

    print("KERNEL_OK")
</pallas_src>

<mosaic_0001>
module attributes {stable_mosaic.version = 11 : i64} {
  func.func @_softmax_kernel(%arg0: i32, %arg1: memref<2x128xf32, #tpu.memory_space<vmem>>, %arg2: memref<2x128xf32, #tpu.memory_space<vmem>>) attributes {dimension_semantics = [#tpu.dimension_semantics<parallel>], iteration_bounds = array<i64: 1>, scalar_prefetch = 0 : i64, scratch_operands = 0 : i64, tpu.core_type = #tpu.core_type<tc>, window_params = [{transform_indices = @transform_0, window_bounds = array<i64: 2, 128>}, {transform_indices = @transform_1, window_bounds = array<i64: 2, 128>}]} {
    %c0 = arith.constant 0 : index
    %c0_0 = arith.constant 0 : index
    %0 = vector.load %arg1[%c0, %c0_0] : memref<2x128xf32, #tpu.memory_space<vmem>>, vector<2x128xf32>
    %cst = arith.constant dense<0xFF800000> : vector<2xf32>
    %1 = vector.multi_reduction <maximumf>, %0, %cst [1] : vector<2x128xf32> to vector<2xf32>
    %2 = vector.shape_cast %1 : vector<2xf32> to vector<2x1xf32>
    %3 = vector.broadcast %2 : vector<2x1xf32> to vector<2x128xf32>
    %4 = arith.subf %0, %3 : vector<2x128xf32>
    %5 = math.exp %4 : vector<2x128xf32>
    %cst_1 = arith.constant dense<0.000000e+00> : vector<2xf32>
    %6 = vector.multi_reduction <add>, %5, %cst_1 [1] : vector<2x128xf32> to vector<2xf32>
    %7 = vector.shape_cast %6 : vector<2xf32> to vector<2x1xf32>
    %8 = tpu.reciprocal %7 {approx = true} : vector<2x1xf32> -> vector<2x1xf32>
    %9 = arith.mulf %7, %8 : vector<2x1xf32>
    %cst_2 = arith.constant 2.000000e+00 : f32
    %10 = vector.broadcast %cst_2 : f32 to vector<2x1xf32>
    %11 = arith.subf %10, %9 : vector<2x1xf32>
    %12 = arith.mulf %8, %11 : vector<2x1xf32>
    %13 = vector.broadcast %12 : vector<2x1xf32> to vector<2x128xf32>
    %14 = arith.mulf %5, %13 : vector<2x128xf32>
    %c0_3 = arith.constant 0 : index
    %c0_4 = arith.constant 0 : index
    %15 = vector.load %arg2[%c0_3, %c0_4] : memref<2x128xf32, #tpu.memory_space<vmem>>, vector<2x128xf32>
    tpu.vector_store %arg2[%c0_3, %c0_4], %14 {strides = array<i32>} : memref<2x128xf32, #tpu.memory_space<vmem>>, vector<2x128xf32>,
    return
  }
  func.func @transform_0(%arg0: i32) -> (i32, i32) {
    %c0_i32 = arith.constant 0 : i32
    %c0_i32_0 = arith.constant 0 : i32
    return %arg0, %c0_i32 : i32, i32
  }
  func.func @transform_1(%arg0: i32) -> (i32, i32) {
    %c0_i32 = arith.constant 0 : i32
    %c0_i32_0 = arith.constant 0 : i32
    return %arg0, %c0_i32 : i32, i32
  }
}

</mosaic_0001>

<llo_original>
// kernel: tpu_custom_call.1
$region0: #{tpu_custom_call.1}
  #allocation0 [shape = 'u32[]', space=smem, size = 0x4, offset = 0x4, fixed_abs, tag = 'smem constant byte address 0x4 - core index']
  #allocation1 [shape = 'u32[144,128]{1,0:T(1,128)}', space=vmem, size = 0x12000, scoped, tag = 'internal scratch']
  %s0 = inlined_call_operand.hbm [shape: f32[2,128], index: 0, kind: input, shape index: {}]
  %s1 = inlined_call_operand.hbm [shape: f32[2,128], index: 1, kind: output, shape index: {}]
  %s2 = sld [smem:[#allocation0]]
  $region18: #{tpu_custom_call.1} parent=0
    _
  %s4 = ssub.s32 1, %s2
  %s5 = scalar_select 0, %s4, %s2
  $region1: #{tpu_custom_call.1} parent=0
    #allocation2 [shape = 'u8[1024]{0}', space=vmem, size = 0x400, scoped, tag = 'input window, operand 0, single buffered']
    #allocation3 [shape = 's32[1]{0}', space=sflag, size = 0x4, scoped, tag = 'scoped memory for tpu_custom_call.1']
    #allocation4 [shape = 's32[1]{0}', space=sflag, size = 0x4, scoped, tag = 'scoped memory for tpu_custom_call.1']
    #allocation5 [shape = 'u8[1024]{0}', space=vmem, size = 0x400, scoped, tag = 'output window, operand 0, single buffered']
    %6 = vsyncpa [#allocation3], 0
    %7 = vsyncpa [#allocation4], 0
    // Predicated region
    $region2: #{tpu_custom_call.1} parent=1 // pred_check
      _
    $region3: #{tpu_custom_call.1} parent=1 // pred_check_branch
      %9 = sbr.rel (0) target = $region5
    $region4: #{tpu_custom_call.1} parent=1 // pred_region
      %s11 = ssub.s32 32, 32
      %12 = vsyncadd [#allocation3], %s11
      %s14 = sshll.u32 [#allocation2], 4
      %s15 = int_to_ptr.vmem [resolvable:$true] %s14
      %17 = dma.hbm_to_vmem [thread:$0]  %s0, 32, %s15, [#allocation3]
    $region5: #{tpu_custom_call.1} parent=1 // pred_fallthru
      _
    // Predicated region
    $region6: #{tpu_custom_call.1} parent=1 // pred_check
      _
    $region7: #{tpu_custom_call.1} parent=1 // pred_check_branch
      %19 = sbr.rel (0) target = $region9
    $region8: #{tpu_custom_call.1} parent=1 // pred_region
      %20 = dma.done [#allocation3], 32
    $region9: #{tpu_custom_call.1} parent=1 // pred_fallthru
      _
    %v21 = vld [vmem:[#allocation2] sm:$0x3]
    %vm22 = vcmask 1041408
    %v23 = vsel %vm22, %v21, -inf
    %24 = vmax.xlane.f32.xlu0 %v23
    %v25 = vpop.xlane.xlu0 %24
    %v26 = vsub.f32 %v21, %v25
    %v27 = vmul.f32 %v26, 1.442695
    %v28 = vpow.pop %v27
    %v29 = vsel %vm22, %v28, 0.0
    %30 = vadd.xlane.f32.xlu0 %v29
    %v31 = vpop.xlane.xlu0 %30
    %v32 = vrcp.pop %v31
    %v33 = vmul.f32 %v31, %v32
    %v34 = vsub.f32 2.0, %v33
    %v35 = vmul.f32 %v32, %v34
    %v36 = vmul.f32 %v28, %v35
    %37 = vst [vmem:[#allocation5] sm:$0x3] %v36
    // Predicated region
    $region10: #{tpu_custom_call.1} parent=1 // pred_check
      _
    $region11: #{tpu_custom_call.1} parent=1 // pred_check_branch
      %39 = sbr.rel (0) target = $region13
    $region12: #{tpu_custom_call.1} parent=1 // pred_region
      %s41 = ssub.s32 32, 32
      %42 = vsyncadd [#allocation4], %s41
      %s44 = sshll.u32 [#allocation5], 4
      %s45 = int_to_ptr.vmem [resolvable:$true] %s44
      %47 = dma.vmem_to_hbm [thread:$0]  %s45, 32, %s1, [#allocation4]
    $region13: #{tpu_custom_call.1} parent=1 // pred_fallthru
      _
    // Predicated region
    $region14: #{tpu_custom_call.1} parent=1 // pred_check
      _
    $region15: #{tpu_custom_call.1} parent=1 // pred_check_branch
      %49 = sbr.rel (0) target = $region17
    $region16: #{tpu_custom_call.1} parent=1 // pred_region
      %50 = dma.done [#allocation4], 32
    $region17: #{tpu_custom_call.1} parent=1 // pred_fallthru
      _
    %51 = vsyncpa [#allocation3], 1
    %52 = vsyncpa [#allocation4], 1

</llo_original>
